<compile_context>
chip_gen: v6e
topology: v6e:2x2x1
jax: 0.10.0
libtpu: 0.0.40
codegen_flags: <defaults>
</compile_context>

<pallas_src>
import functools

import numpy as np

import jax
import jax.numpy as jnp
from jax import lax
from jax.experimental import pallas as pl
from jax.experimental.pallas import tpu as pltpu


def _dilated_conv_kernel(w_ref, mask_ref, x_ref, o_ref, xpad_ref, slab_ref, *,
                         dilations, temp, H, W, K_pad, PAD):
    """One batch element: all dilation splits, all groups.

    w_ref:    VMEM (S, temp, K_pad) bf16 block-diagonal tap-major im2col
              weights; column index = (kh*3 + kw)*temp + cin_within_split.
    mask_ref: VMEM (S, 3, H*W) bf16 horizontal wrap-validity masks per kw.
    x_ref:    VMEM (1, C, H*W) input block (spatial flattened, lane dense).
    o_ref:    VMEM (1, C, H*W) output block.
    xpad_ref: VMEM scratch (C, PAD + H*W + PAD) bf16 flat zero-haloed input.
    slab_ref: VMEM scratch (K_pad, H*W) bf16 tap-major im2col patch slab.
    """
    S = len(dilations)
    HW = H * W
    C = x_ref.shape[1]
    K = 9 * temp
    bf16 = jnp.bfloat16

    # Flat zero-haloed copy of this batch element's input (single cast).
    # Halo re-zeroed every step: scratch persists, but a program_id==0 gate
    # breaks when the parallel batch axis is split across TensorCores.
    xpad_ref[:, 0:PAD] = jnp.zeros((C, PAD), bf16)
    xpad_ref[:, PAD + HW:PAD + HW + PAD] = jnp.zeros((C, PAD), bf16)
    xpad_ref[:, PAD:PAD + HW] = x_ref[0].astype(bf16)

    # Zero the K-padding rows of the slab (their weight columns are zero, but
    # uninitialized VMEM could hold NaNs and 0 * NaN = NaN).
    if K_pad > K:
        slab_ref[K:K_pad, :] = jnp.zeros((K_pad - K, HW), bf16)

    for si, d in enumerate(dilations):
        c0 = si * temp
        # Hoist this split's three horizontal masks out of the tap loop.
        m_kw = [mask_ref[si, kw:kw + 1, :] for kw in range(3)]

        # Tap-major slab: 9 shifted multi-sublane (temp, HW) blocks per split.
        for kh in range(3):
            for kw in range(3):
                t = kh * 3 + kw
                dh = (kh - 1) * d
                dw = (kw - 1) * d
                s = PAD + dh * W + dw              # static flat offset
                blk = xpad_ref[c0:c0 + temp, s:s + HW]
                if dw != 0:
                    blk = blk * m_kw[kw]           # kill row wrap-around
                slab_ref[t * temp:(t + 1) * temp, :] = blk

        # One block-diagonal matmul per split on the MXU: bf16 in, f32 acc.
        acc = jnp.dot(w_ref[si], slab_ref[...],
                      preferred_element_type=jnp.float32)
        o_ref[0, c0:c0 + temp, :] = acc.astype(o_ref.dtype)


def dilated_conv_forward(x, weights, dilations, group_width):
    """Equivalent of DilatedConv.forward (stride=1, bias=False).

    x: (N, C, H, W); weights[i]: (C//len(dilations), group_width, 3, 3)
    in PyTorch grouped OIHW layout.
    """
    N, C, H, W = x.shape
    S = len(dilations)
    assert C % S == 0, "channels must split evenly across dilations"
    temp = C // S
    assert temp % group_width == 0, "split channels must divide by group_width"
    groups = temp // group_width
    Cg = group_width
    HW = H * W                     # best perf when HW is a multiple of 128
    K = 9 * temp
    K_pad = ((K + 15) // 16) * 16                  # bf16 sublane-aligned K
    d_max = max(dilations)
    PAD = ((d_max * (W + 1) + 127) // 128) * 128   # flat halo, lane aligned

    # Block-diagonal, tap-major im2col weights: (S, temp, K_pad) bf16 with
    # w_all[si, cout, t*temp + cin] nonzero only when cin is in cout's group.
    eye = jnp.eye(groups, dtype=jnp.float32)
    w_list = []
    for si in range(S):
        wi = weights[si].astype(jnp.float32).reshape(groups, Cg, Cg, 9)
        bd = jnp.einsum('goit,gh->tgohi', wi, eye).reshape(9, temp, temp)
        wm = jnp.transpose(bd, (1, 0, 2)).reshape(temp, K)
        w_list.append(jnp.pad(wm, ((0, 0), (0, K_pad - K))))
    w_all = jnp.stack(w_list, axis=0).astype(jnp.bfloat16)

    # Horizontal validity masks: flat shifted slices wrap across image rows;
    # kill positions where the shifted column index leaves [0, W).
    col = np.arange(HW, dtype=np.int64) % W
    mask_np = np.ones((S, 3, HW), np.float32)
    for si, d in enumerate(dilations):
        for kw in range(3):
            dw = (kw - 1) * d
            mask_np[si, kw] = ((col + dw >= 0) & (col + dw < W)).astype(np.float32)
    masks = jnp.asarray(mask_np, dtype=jnp.bfloat16)

    x_flat = x.reshape(N, C, HW)                   # lane-dense spatial layout

    kernel = functools.partial(
        _dilated_conv_kernel, dilations=tuple(dilations), temp=temp,
        H=H, W=W, K_pad=K_pad, PAD=PAD)

    itemsize = jnp.dtype(x.dtype).itemsize
    cost = pl.CostEstimate(
        flops=2 * N * C * Cg * 9 * HW,
        transcendentals=0,
        bytes_accessed=int(2 * N * C * HW * itemsize
                           + w_all.size * 2 + masks.size * 2))

    out_flat = pl.pallas_call(
        kernel,
        out_shape=jax.ShapeDtypeStruct((N, C, HW), x.dtype),
        grid=(N,),
        in_specs=[
            pl.BlockSpec((S, temp, K_pad), lambda n: (0, 0, 0)),
            pl.BlockSpec((S, 3, HW), lambda n: (0, 0, 0)),
            pl.BlockSpec((1, C, HW), lambda n: (n, 0, 0)),
        ],
        out_specs=pl.BlockSpec((1, C, HW), lambda n: (n, 0, 0)),
        scratch_shapes=[
            pltpu.VMEM((C, 2 * PAD + HW), jnp.bfloat16),   # flat padded input
            pltpu.VMEM((K_pad, HW), jnp.bfloat16),         # im2col patch slab
        ],
        compiler_params=pltpu.CompilerParams(
            dimension_semantics=("parallel",),
            vmem_limit_bytes=64 * 1024 * 1024),
        cost_estimate=cost,
    )(w_all, masks, x_flat)

    return out_flat.reshape(N, C, H, W)


def _reference_forward(x, weights, dilations, group_width):
    """Pure-JAX reference using lax.conv_general_dilated (high precision)."""
    S = len(dilations)
    splits = jnp.split(x, S, axis=1)
    outs = []
    for i, d in enumerate(dilations):
        groups = splits[i].shape[1] // group_width
        outs.append(
            lax.conv_general_dilated(
                splits[i], weights[i],
                window_strides=(1, 1),
                padding=((d, d), (d, d)),
                rhs_dilation=(d, d),
                dimension_numbers=("NCHW", "OIHW", "NCHW"),
                feature_group_count=groups,
                precision=lax.Precision.HIGHEST))
    return jnp.concatenate(outs, axis=1)


if __name__ == "__main__":
    # Module config: DilatedConv(w=8, dilations=[1, 2], group_width=2,
    #                            stride=1, bias=False)
    w_channels = 8
    dilations = (1, 2)
    group_width = 2
    num_splits = len(dilations)
    temp = w_channels // num_splits  # 4 channels per split

    key = jax.random.PRNGKey(0)
    kx, *kw = jax.random.split(key, 1 + num_splits)

    N, H, W = 2, 16, 16
    x = jax.random.normal(kx, (N, w_channels, H, W), dtype=jnp.float32)

    weights = [
        0.1 * jax.random.normal(kw[i], (temp, group_width, 3, 3),
                                dtype=jnp.float32)
        for i in range(num_splits)
    ]

    out = dilated_conv_forward(x, weights, dilations, group_width)
    out = jax.block_until_ready(out)

    ref = _reference_forward(x, weights, dilations, group_width)
    assert out.shape == (N, w_channels, H, W)
    # Tolerance accounts for bf16 matmul operands (f32 accumulation); the
    # weights are ~0.1-scale so bf16-class error is ~1e-3 here.
    err = float(jnp.max(jnp.abs(out - ref)))
    assert err < 5e-2, f"max abs error {err}"

    print("KERNEL_OK")
</pallas_src>

<mosaic_0001>
module attributes {stable_mosaic.version = 11 : i64} {
  func.func @_dilated_conv_kernel(%arg0: i32, %arg1: memref<2x4x48xbf16, #tpu.memory_space<vmem>>, %arg2: memref<2x3x256xbf16, #tpu.memory_space<vmem>>, %arg3: memref<1x8x256xf32, #tpu.memory_space<vmem>>, %arg4: memref<1x8x256xf32, #tpu.memory_space<vmem>>, %arg5: memref<8x512xbf16, #tpu.memory_space<vmem>>, %arg6: memref<48x256xbf16, #tpu.memory_space<vmem>>) attributes {dimension_semantics = [#tpu.dimension_semantics<parallel>], iteration_bounds = array<i64: 2>, scalar_prefetch = 0 : i64, scratch_operands = 2 : i64, tpu.core_type = #tpu.core_type<tc>, window_params = [{pipeline_mode = #tpu.pipeline_mode<synchronous>, transform_indices = @transform_0, window_bounds = array<i64: 2, 4, 48>}, {pipeline_mode = #tpu.pipeline_mode<synchronous>, transform_indices = @transform_1, window_bounds = array<i64: 2, 3, 256>}, {transform_indices = @transform_2, window_bounds = array<i64: 1, 8, 256>}, {transform_indices = @transform_3, window_bounds = array<i64: 1, 8, 256>}]} {
    %cst = arith.constant 0.000000e+00 : bf16
    %0 = vector.broadcast %cst : bf16 to vector<8x128xbf16>
    %c0 = arith.constant 0 : index
    %c0_0 = arith.constant 0 : index
    %1 = vector.load %arg5[%c0, %c0_0] : memref<8x512xbf16, #tpu.memory_space<vmem>>, vector<8x128xbf16>
    tpu.vector_store %arg5[%c0, %c0_0], %0 {strides = array<i32>} : memref<8x512xbf16, #tpu.memory_space<vmem>>, vector<8x128xbf16>,
    %cst_1 = arith.constant 0.000000e+00 : bf16
    %2 = vector.broadcast %cst_1 : bf16 to vector<8x128xbf16>
    %c0_2 = arith.constant 0 : index
    %c384 = arith.constant 384 : index
    %3 = vector.load %arg5[%c0_2, %c384] : memref<8x512xbf16, #tpu.memory_space<vmem>>, vector<8x128xbf16>
    tpu.vector_store %arg5[%c0_2, %c384], %2 {strides = array<i32>} : memref<8x512xbf16, #tpu.memory_space<vmem>>, vector<8x128xbf16>,
    %c0_3 = arith.constant 0 : index
    %c0_4 = arith.constant 0 : index
    %c0_5 = arith.constant 0 : index
    %4 = vector.load %arg3[%c0_3, %c0_4, %c0_5] : memref<1x8x256xf32, #tpu.memory_space<vmem>>, vector<1x8x256xf32>
    %5 = vector.shape_cast %4 : vector<1x8x256xf32> to vector<8x256xf32>
    %6 = arith.truncf %5 : vector<8x256xf32> to vector<8x256xbf16>
    %c0_6 = arith.constant 0 : index
    %c128 = arith.constant 128 : index
    %7 = vector.load %arg5[%c0_6, %c128] : memref<8x512xbf16, #tpu.memory_space<vmem>>, vector<8x256xbf16>
    tpu.vector_store %arg5[%c0_6, %c128], %6 {strides = array<i32>} : memref<8x512xbf16, #tpu.memory_space<vmem>>, vector<8x256xbf16>,
    %cst_7 = arith.constant 0.000000e+00 : bf16
    %8 = vector.broadcast %cst_7 : bf16 to vector<12x256xbf16>
    %c36 = arith.constant 36 : index
    %c0_8 = arith.constant 0 : index
    %9 = vector.load %arg6[%c36, %c0_8] : memref<48x256xbf16, #tpu.memory_space<vmem>>, vector<12x256xbf16>
    tpu.vector_store %arg6[%c36, %c0_8], %8 {strides = array<i32>} : memref<48x256xbf16, #tpu.memory_space<vmem>>, vector<12x256xbf16>,
    %c0_9 = arith.constant 0 : index
    %c0_10 = arith.constant 0 : index
    %c0_11 = arith.constant 0 : index
    %10 = vector.load %arg2[%c0_9, %c0_10, %c0_11] : memref<2x3x256xbf16, #tpu.memory_space<vmem>>, vector<1x1x256xbf16>
    %11 = vector.shape_cast %10 : vector<1x1x256xbf16> to vector<1x256xbf16>
    %c0_12 = arith.constant 0 : index
    %c2 = arith.constant 2 : index
    %c0_13 = arith.constant 0 : index
    %12 = vector.load %arg2[%c0_12, %c2, %c0_13] : memref<2x3x256xbf16, #tpu.memory_space<vmem>>, vector<1x1x256xbf16>
    %13 = vector.shape_cast %12 : vector<1x1x256xbf16> to vector<1x256xbf16>
    %c0_14 = arith.constant 0 : index
    %c111 = arith.constant 111 : index
    %14 = vector.load %arg5[%c0_14, %c111] : memref<8x512xbf16, #tpu.memory_space<vmem>>, vector<4x256xbf16>
    %15 = vector.broadcast %11 : vector<1x256xbf16> to vector<4x256xbf16>
    %16 = arith.mulf %14, %15 : vector<4x256xbf16>
    %c0_15 = arith.constant 0 : index
    %c0_16 = arith.constant 0 : index
    %17 = vector.load %arg6[%c0_15, %c0_16] : memref<48x256xbf16, #tpu.memory_space<vmem>>, vector<4x256xbf16>
    tpu.vector_store %arg6[%c0_15, %c0_16], %16 {strides = array<i32>} : memref<48x256xbf16, #tpu.memory_space<vmem>>, vector<4x256xbf16>,
    %c0_17 = arith.constant 0 : index
    %c112 = arith.constant 112 : index
    %18 = vector.load %arg5[%c0_17, %c112] : memref<8x512xbf16, #tpu.memory_space<vmem>>, vector<4x256xbf16>
    %c4 = arith.constant 4 : index
    %c0_18 = arith.constant 0 : index
    %19 = vector.load %arg6[%c4, %c0_18] : memref<48x256xbf16, #tpu.memory_space<vmem>>, vector<4x256xbf16>
    tpu.vector_store %arg6[%c4, %c0_18], %18 {strides = array<i32>} : memref<48x256xbf16, #tpu.memory_space<vmem>>, vector<4x256xbf16>,
    %c0_19 = arith.constant 0 : index
    %c113 = arith.constant 113 : index
    %20 = vector.load %arg5[%c0_19, %c113] : memref<8x512xbf16, #tpu.memory_space<vmem>>, vector<4x256xbf16>
    %21 = vector.broadcast %13 : vector<1x256xbf16> to vector<4x256xbf16>
    %22 = arith.mulf %20, %21 : vector<4x256xbf16>
    %c8 = arith.constant 8 : index
    %c0_20 = arith.constant 0 : index
    %23 = vector.load %arg6[%c8, %c0_20] : memref<48x256xbf16, #tpu.memory_space<vmem>>, vector<4x256xbf16>
    tpu.vector_store %arg6[%c8, %c0_20], %22 {strides = array<i32>} : memref<48x256xbf16, #tpu.memory_space<vmem>>, vector<4x256xbf16>,
    %c0_21 = arith.constant 0 : index
    %c127 = arith.constant 127 : index
    %24 = vector.load %arg5[%c0_21, %c127] : memref<8x512xbf16, #tpu.memory_space<vmem>>, vector<4x256xbf16>
    %25 = vector.broadcast %11 : vector<1x256xbf16> to vector<4x256xbf16>
    %26 = arith.mulf %24, %25 : vector<4x256xbf16>
    %c12 = arith.constant 12 : index
    %c0_22 = arith.constant 0 : index
    %27 = vector.load %arg6[%c12, %c0_22] : memref<48x256xbf16, #tpu.memory_space<vmem>>, vector<4x256xbf16>
    tpu.vector_store %arg6[%c12, %c0_22], %26 {strides = array<i32>} : memref<48x256xbf16, #tpu.memory_space<vmem>>, vector<4x256xbf16>,
    %c0_23 = arith.constant 0 : index
    %c128_24 = arith.constant 128 : index
    %28 = vector.load %arg5[%c0_23, %c128_24] : memref<8x512xbf16, #tpu.memory_space<vmem>>, vector<4x256xbf16>
    %c16 = arith.constant 16 : index
    %c0_25 = arith.constant 0 : index
    %29 = vector.load %arg6[%c16, %c0_25] : memref<48x256xbf16, #tpu.memory_space<vmem>>, vector<4x256xbf16>
    tpu.vector_store %arg6[%c16, %c0_25], %28 {strides = array<i32>} : memref<48x256xbf16, #tpu.memory_space<vmem>>, vector<4x256xbf16>,
    %c0_26 = arith.constant 0 : index
    %c129 = arith.constant 129 : index
    %30 = vector.load %arg5[%c0_26, %c129] : memref<8x512xbf16, #tpu.memory_space<vmem>>, vector<4x256xbf16>
    %31 = vector.broadcast %13 : vector<1x256xbf16> to vector<4x256xbf16>
    %32 = arith.mulf %30, %31 : vector<4x256xbf16>
    %c20 = arith.constant 20 : index
    %c0_27 = arith.constant 0 : index
    %33 = vector.load %arg6[%c20, %c0_27] : memref<48x256xbf16, #tpu.memory_space<vmem>>, vector<4x256xbf16>
    tpu.vector_store %arg6[%c20, %c0_27], %32 {strides = array<i32>} : memref<48x256xbf16, #tpu.memory_space<vmem>>, vector<4x256xbf16>,
    %c0_28 = arith.constant 0 : index
    %c143 = arith.constant 143 : index
    %34 = vector.load %arg5[%c0_28, %c143] : memref<8x512xbf16, #tpu.memory_space<vmem>>, vector<4x256xbf16>
    %35 = vector.broadcast %11 : vector<1x256xbf16> to vector<4x256xbf16>
    %36 = arith.mulf %34, %35 : vector<4x256xbf16>
    %c24 = arith.constant 24 : index
    %c0_29 = arith.constant 0 : index
    %37 = vector.load %arg6[%c24, %c0_29] : memref<48x256xbf16, #tpu.memory_space<vmem>>, vector<4x256xbf16>
    tpu.vector_store %arg6[%c24, %c0_29], %36 {strides = array<i32>} : memref<48x256xbf16, #tpu.memory_space<vmem>>, vector<4x256xbf16>,
    %c0_30 = arith.constant 0 : index
    %c144 = arith.constant 144 : index
    %38 = vector.load %arg5[%c0_30, %c144] : memref<8x512xbf16, #tpu.memory_space<vmem>>, vector<4x256xbf16>
    %c28 = arith.constant 28 : index
    %c0_31 = arith.constant 0 : index
    %39 = vector.load %arg6[%c28, %c0_31] : memref<48x256xbf16, #tpu.memory_space<vmem>>, vector<4x256xbf16>
    tpu.vector_store %arg6[%c28, %c0_31], %38 {strides = array<i32>} : memref<48x256xbf16, #tpu.memory_space<vmem>>, vector<4x256xbf16>,
    %c0_32 = arith.constant 0 : index
    %c145 = arith.constant 145 : index
    %40 = vector.load %arg5[%c0_32, %c145] : memref<8x512xbf16, #tpu.memory_space<vmem>>, vector<4x256xbf16>
    %41 = vector.broadcast %13 : vector<1x256xbf16> to vector<4x256xbf16>
    %42 = arith.mulf %40, %41 : vector<4x256xbf16>
    %c32 = arith.constant 32 : index
    %c0_33 = arith.constant 0 : index
    %43 = vector.load %arg6[%c32, %c0_33] : memref<48x256xbf16, #tpu.memory_space<vmem>>, vector<4x256xbf16>
    tpu.vector_store %arg6[%c32, %c0_33], %42 {strides = array<i32>} : memref<48x256xbf16, #tpu.memory_space<vmem>>, vector<4x256xbf16>,
    %c0_34 = arith.constant 0 : index
    %c0_35 = arith.constant 0 : index
    %c0_36 = arith.constant 0 : index
    %44 = vector.load %arg1[%c0_34, %c0_35, %c0_36] : memref<2x4x48xbf16, #tpu.memory_space<vmem>>, vector<1x4x48xbf16>
    %45 = vector.shape_cast %44 : vector<1x4x48xbf16> to vector<4x48xbf16>
    %c0_37 = arith.constant 0 : index
    %c0_38 = arith.constant 0 : index
    %46 = vector.load %arg6[%c0_37, %c0_38] : memref<48x256xbf16, #tpu.memory_space<vmem>>, vector<48x256xbf16>
    %cst_39 = arith.constant dense<0.000000e+00> : vector<4x256xf32>
    %47 = tpu.matmul %45, %46, %cst_39 {dimension_numbers = #tpu.dot_dimension_numbers<[1], [0], [0], [1], [0, 0, 1, 1], [], []>} : vector<4x48xbf16>, vector<48x256xbf16>, vector<4x256xf32> -> vector<4x256xf32>
    %c0_40 = arith.constant 0 : index
    %c0_41 = arith.constant 0 : index
    %c0_42 = arith.constant 0 : index
    %48 = vector.load %arg4[%c0_40, %c0_41, %c0_42] : memref<1x8x256xf32, #tpu.memory_space<vmem>>, vector<1x4x256xf32>
    %49 = vector.shape_cast %48 : vector<1x4x256xf32> to vector<4x256xf32>
    %50 = vector.shape_cast %47 : vector<4x256xf32> to vector<1x4x256xf32>
    tpu.vector_store %arg4[%c0_40, %c0_41, %c0_42], %50 {strides = array<i32>} : memref<1x8x256xf32, #tpu.memory_space<vmem>>, vector<1x4x256xf32>,
    %c1 = arith.constant 1 : index
    %c0_43 = arith.constant 0 : index
    %c0_44 = arith.constant 0 : index
    %51 = vector.load %arg2[%c1, %c0_43, %c0_44] : memref<2x3x256xbf16, #tpu.memory_space<vmem>>, vector<1x1x256xbf16>
    %52 = vector.shape_cast %51 : vector<1x1x256xbf16> to vector<1x256xbf16>
    %c1_45 = arith.constant 1 : index
    %c2_46 = arith.constant 2 : index
    %c0_47 = arith.constant 0 : index
    %53 = vector.load %arg2[%c1_45, %c2_46, %c0_47] : memref<2x3x256xbf16, #tpu.memory_space<vmem>>, vector<1x1x256xbf16>
    %54 = vector.shape_cast %53 : vector<1x1x256xbf16> to vector<1x256xbf16>
    %c4_48 = arith.constant 4 : index
    %c94 = arith.constant 94 : index
    %55 = vector.load %arg5[%c4_48, %c94] : memref<8x512xbf16, #tpu.memory_space<vmem>>, vector<4x256xbf16>
    %56 = vector.broadcast %52 : vector<1x256xbf16> to vector<4x256xbf16>
    %57 = arith.mulf %55, %56 : vector<4x256xbf16>
    %c0_49 = arith.constant 0 : index
    %c0_50 = arith.constant 0 : index
    %58 = vector.load %arg6[%c0_49, %c0_50] : memref<48x256xbf16, #tpu.memory_space<vmem>>, vector<4x256xbf16>
    tpu.vector_store %arg6[%c0_49, %c0_50], %57 {strides = array<i32>} : memref<48x256xbf16, #tpu.memory_space<vmem>>, vector<4x256xbf16>,
    %c4_51 = arith.constant 4 : index
    %c96 = arith.constant 96 : index
    %59 = vector.load %arg5[%c4_51, %c96] : memref<8x512xbf16, #tpu.memory_space<vmem>>, vector<4x256xbf16>
    %c4_52 = arith.constant 4 : index
    %c0_53 = arith.constant 0 : index
    %60 = vector.load %arg6[%c4_52, %c0_53] : memref<48x256xbf16, #tpu.memory_space<vmem>>, vector<4x256xbf16>
    tpu.vector_store %arg6[%c4_52, %c0_53], %59 {strides = array<i32>} : memref<48x256xbf16, #tpu.memory_space<vmem>>, vector<4x256xbf16>,
    %c4_54 = arith.constant 4 : index
    %c98 = arith.constant 98 : index
    %61 = vector.load %arg5[%c4_54, %c98] : memref<8x512xbf16, #tpu.memory_space<vmem>>, vector<4x256xbf16>
    %62 = vector.broadcast %54 : vector<1x256xbf16> to vector<4x256xbf16>
    %63 = arith.mulf %61, %62 : vector<4x256xbf16>
    %c8_55 = arith.constant 8 : index
    %c0_56 = arith.constant 0 : index
    %64 = vector.load %arg6[%c8_55, %c0_56] : memref<48x256xbf16, #tpu.memory_space<vmem>>, vector<4x256xbf16>
    tpu.vector_store %arg6[%c8_55, %c0_56], %63 {strides = array<i32>} : memref<48x256xbf16, #tpu.memory_space<vmem>>, vector<4x256xbf16>,
    %c4_57 = arith.constant 4 : index
    %c126 = arith.constant 126 : index
    %65 = vector.load %arg5[%c4_57, %c126] : memref<8x512xbf16, #tpu.memory_space<vmem>>, vector<4x256xbf16>
    %66 = vector.broadcast %52 : vector<1x256xbf16> to vector<4x256xbf16>
    %67 = arith.mulf %65, %66 : vector<4x256xbf16>
    %c12_58 = arith.constant 12 : index
    %c0_59 = arith.constant 0 : index
    %68 = vector.load %arg6[%c12_58, %c0_59] : memref<48x256xbf16, #tpu.memory_space<vmem>>, vector<4x256xbf16>
    tpu.vector_store %arg6[%c12_58, %c0_59], %67 {strides = array<i32>} : memref<48x256xbf16, #tpu.memory_space<vmem>>, vector<4x256xbf16>,
    %c4_60 = arith.constant 4 : index
    %c128_61 = arith.constant 128 : index
    %69 = vector.load %arg5[%c4_60, %c128_61] : memref<8x512xbf16, #tpu.memory_space<vmem>>, vector<4x256xbf16>
    %c16_62 = arith.constant 16 : index
    %c0_63 = arith.constant 0 : index
    %70 = vector.load %arg6[%c16_62, %c0_63] : memref<48x256xbf16, #tpu.memory_space<vmem>>, vector<4x256xbf16>
    tpu.vector_store %arg6[%c16_62, %c0_63], %69 {strides = array<i32>} : memref<48x256xbf16, #tpu.memory_space<vmem>>, vector<4x256xbf16>,
    %c4_64 = arith.constant 4 : index
    %c130 = arith.constant 130 : index
    %71 = vector.load %arg5[%c4_64, %c130] : memref<8x512xbf16, #tpu.memory_space<vmem>>, vector<4x256xbf16>
    %72 = vector.broadcast %54 : vector<1x256xbf16> to vector<4x256xbf16>
    %73 = arith.mulf %71, %72 : vector<4x256xbf16>
    %c20_65 = arith.constant 20 : index
    %c0_66 = arith.constant 0 : index
    %74 = vector.load %arg6[%c20_65, %c0_66] : memref<48x256xbf16, #tpu.memory_space<vmem>>, vector<4x256xbf16>
    tpu.vector_store %arg6[%c20_65, %c0_66], %73 {strides = array<i32>} : memref<48x256xbf16, #tpu.memory_space<vmem>>, vector<4x256xbf16>,
    %c4_67 = arith.constant 4 : index
    %c158 = arith.constant 158 : index
    %75 = vector.load %arg5[%c4_67, %c158] : memref<8x512xbf16, #tpu.memory_space<vmem>>, vector<4x256xbf16>
    %76 = vector.broadcast %52 : vector<1x256xbf16> to vector<4x256xbf16>
    %77 = arith.mulf %75, %76 : vector<4x256xbf16>
    %c24_68 = arith.constant 24 : index
    %c0_69 = arith.constant 0 : index
    %78 = vector.load %arg6[%c24_68, %c0_69] : memref<48x256xbf16, #tpu.memory_space<vmem>>, vector<4x256xbf16>
    tpu.vector_store %arg6[%c24_68, %c0_69], %77 {strides = array<i32>} : memref<48x256xbf16, #tpu.memory_space<vmem>>, vector<4x256xbf16>,
    %c4_70 = arith.constant 4 : index
    %c160 = arith.constant 160 : index
    %79 = vector.load %arg5[%c4_70, %c160] : memref<8x512xbf16, #tpu.memory_space<vmem>>, vector<4x256xbf16>
    %c28_71 = arith.constant 28 : index
    %c0_72 = arith.constant 0 : index
    %80 = vector.load %arg6[%c28_71, %c0_72] : memref<48x256xbf16, #tpu.memory_space<vmem>>, vector<4x256xbf16>
    tpu.vector_store %arg6[%c28_71, %c0_72], %79 {strides = array<i32>} : memref<48x256xbf16, #tpu.memory_space<vmem>>, vector<4x256xbf16>,
    %c4_73 = arith.constant 4 : index
    %c162 = arith.constant 162 : index
    %81 = vector.load %arg5[%c4_73, %c162] : memref<8x512xbf16, #tpu.memory_space<vmem>>, vector<4x256xbf16>
    %82 = vector.broadcast %54 : vector<1x256xbf16> to vector<4x256xbf16>
    %83 = arith.mulf %81, %82 : vector<4x256xbf16>
    %c32_74 = arith.constant 32 : index
    %c0_75 = arith.constant 0 : index
    %84 = vector.load %arg6[%c32_74, %c0_75] : memref<48x256xbf16, #tpu.memory_space<vmem>>, vector<4x256xbf16>
    tpu.vector_store %arg6[%c32_74, %c0_75], %83 {strides = array<i32>} : memref<48x256xbf16, #tpu.memory_space<vmem>>, vector<4x256xbf16>,
    %c1_76 = arith.constant 1 : index
    %c0_77 = arith.constant 0 : index
    %c0_78 = arith.constant 0 : index
    %85 = vector.load %arg1[%c1_76, %c0_77, %c0_78] : memref<2x4x48xbf16, #tpu.memory_space<vmem>>, vector<1x4x48xbf16>
    %86 = vector.shape_cast %85 : vector<1x4x48xbf16> to vector<4x48xbf16>
    %c0_79 = arith.constant 0 : index
    %c0_80 = arith.constant 0 : index
    %87 = vector.load %arg6[%c0_79, %c0_80] : memref<48x256xbf16, #tpu.memory_space<vmem>>, vector<48x256xbf16>
    %cst_81 = arith.constant dense<0.000000e+00> : vector<4x256xf32>
    %88 = tpu.matmul %86, %87, %cst_81 {dimension_numbers = #tpu.dot_dimension_numbers<[1], [0], [0], [1], [0, 0, 1, 1], [], []>} : vector<4x48xbf16>, vector<48x256xbf16>, vector<4x256xf32> -> vector<4x256xf32>
    %c0_82 = arith.constant 0 : index
    %c4_83 = arith.constant 4 : index
    %c0_84 = arith.constant 0 : index
    %89 = vector.load %arg4[%c0_82, %c4_83, %c0_84] : memref<1x8x256xf32, #tpu.memory_space<vmem>>, vector<1x4x256xf32>
    %90 = vector.shape_cast %89 : vector<1x4x256xf32> to vector<4x256xf32>
    %91 = vector.shape_cast %88 : vector<4x256xf32> to vector<1x4x256xf32>
    tpu.vector_store %arg4[%c0_82, %c4_83, %c0_84], %91 {strides = array<i32>} : memref<1x8x256xf32, #tpu.memory_space<vmem>>, vector<1x4x256xf32>,
    return
  }
  func.func @transform_0(%arg0: i32) -> (i32, i32, i32) {
    %c0_i32 = arith.constant 0 : i32
    %c0_i32_0 = arith.constant 0 : i32
    %c0_i32_1 = arith.constant 0 : i32
    %c0_i32_2 = arith.constant 0 : i32
    return %c0_i32, %c0_i32_0, %c0_i32_1 : i32, i32, i32
  }
  func.func @transform_1(%arg0: i32) -> (i32, i32, i32) {
    %c0_i32 = arith.constant 0 : i32
    %c0_i32_0 = arith.constant 0 : i32
    %c0_i32_1 = arith.constant 0 : i32
    %c0_i32_2 = arith.constant 0 : i32
    return %c0_i32, %c0_i32_0, %c0_i32_1 : i32, i32, i32
  }
  func.func @transform_2(%arg0: i32) -> (i32, i32, i32) {
    %c0_i32 = arith.constant 0 : i32
    %c0_i32_0 = arith.constant 0 : i32
    %c0_i32_1 = arith.constant 0 : i32
    return %arg0, %c0_i32, %c0_i32_0 : i32, i32, i32
  }
  func.func @transform_3(%arg0: i32) -> (i32, i32, i32) {
    %c0_i32 = arith.constant 0 : i32
    %c0_i32_0 = arith.constant 0 : i32
    %c0_i32_1 = arith.constant 0 : i32
    return %arg0, %c0_i32, %c0_i32_0 : i32, i32, i32
  }
}

</mosaic_0001>

<llo_original>
// kernel: tpu_custom_call.1
$region0: #{tpu_custom_call.1}
  #allocation0 [shape = 'u32[]', space=smem, size = 0x4, offset = 0x4, fixed_abs, tag = 'smem constant byte address 0x4 - core index']
  #allocation1 [shape = 'u32[144,128]{1,0:T(1,128)}', space=vmem, size = 0x12000, scoped, tag = 'internal scratch']
  #allocation2 [shape = 'bf16[8,512]{1,0:T(8,128)(2,1)}', space=vmem, size = 0x2000, scoped, tag = 'scratch operand']
  #allocation3 [shape = 'bf16[48,256]{1,0:T(8,128)(2,1)}', space=vmem, size = 0x6000, scoped, tag = 'scratch operand']
  %s0 = inlined_call_operand.vmem [shape: bf16[2,4,48], index: 0, kind: input, shape index: {}]
  %s1 = inlined_call_operand.vmem [shape: bf16[2,3,256], index: 1, kind: input, shape index: {}]
  %s2 = inlined_call_operand.hbm [shape: f32[2,8,256], index: 2, kind: input, shape index: {}]
  %s3 = inlined_call_operand.hbm [shape: f32[2,8,256], index: 3, kind: output, shape index: {}]
  %s4 = sld [smem:[#allocation0]]
  $region49: #{tpu_custom_call.1} parent=0
    _
  %s6 = ssub.s32 1, %s4
  %s7 = scalar_select 0, %s6, %s4
  $region1: #{tpu_custom_call.1} parent=0
    #allocation4 [shape = 'u8[16384]{0}', space=vmem, size = 0x4000, scoped, tag = 'input window, operand 2']
    #allocation5 [shape = 's32[2]{0}', space=sflag, size = 0x8, scoped, tag = 'scoped memory for tpu_custom_call.1']
    #allocation6 [shape = 's32[2]{0}', space=sflag, size = 0x8, scoped, tag = 'scoped memory for tpu_custom_call.1']
    #allocation7 [shape = 'u8[16384]{0}', space=vmem, size = 0x4000, scoped, tag = 'output window, operand 0']
    %8 = vsyncpa [#allocation5], 0
    %s9 = scalar_lea.sflag [#allocation5], 1
    %10 = vsyncpa %s9, 0
    %11 = vsyncpa [#allocation6], 0
    %s12 = scalar_lea.sflag [#allocation6], 1
    %13 = vsyncpa %s12, 0
    loop: start=0, step=1, limit=4
    $region2: #{tpu_custom_call.1} parent=1 // loop_pre_header
      _
    $region3: #{tpu_custom_call.1} parent=1 // loop_header
      %s15 = sphi 0, %s19
      %p16 = scmp.ge.s32.totalorder %s15, 4
      %s23 = sphi 0, %s23
      %s25 = sphi 0, %s23
      %s26 = sphi 0, %s25
      %s40 = sphi 0, %s26
      %s44 = sphi 0, %s44
      %s46 = sphi 0, %s44
      %s47 = sphi 0, %s46
      %s61 = sphi 0, %s47
      %s67 = sphi 0, %s69
      %s70 = sphi 0, %s67
      %s71 = sphi 0, %s70
      %s87 = sphi 0, %s71
      %s93 = sphi 0, %s95
      %s96 = sphi 0, %s93
      %s97 = sphi 0, %s96
      %s113 = sphi 0, %s97
    $region4: #{tpu_custom_call.1} parent=1 // loop_header_branch
      %18 = sbr.rel (%p16) target = $region8
    $region5: #{tpu_custom_call.1} parent=1 // loop_body
      %s20 = ssub.s32 %s15, 1
      %s21 = ssub.s32 %s15, 2
      %s22 = sadd.s32 %s15, 1
      %s24 = sadd.s32 %s23, 1
      %p27 = scmp.eq.s32.totalorder %s15, 1
      %p28 = scmp.ne.s32.totalorder %s23, %s25
      %p29 = scmp.eq.s32.totalorder %s15, 0
      %p30 = por %p28, %p29
      %p31 = scmp.ne.s32.totalorder %s23, %s25
      %p32 = scmp.eq.s32.totalorder %s20, 1
      %p33 = por %p31, %p32
      %p34 = scmp.ne.s32.totalorder %s25, %s26
      %p35 = scmp.eq.s32.totalorder %s20, 0
      %p36 = por %p34, %p35
      %p37 = scmp.ne.s32.totalorder %s25, %s26
      %p38 = scmp.eq.s32.totalorder %s21, 1
      %p39 = por %p37, %p38
      %p41 = scmp.ne.s32.totalorder %s26, %s40
      %p42 = scmp.eq.s32.totalorder %s21, 0
      %p43 = por %p41, %p42
      %s45 = sadd.s32 %s44, 1
      %p48 = scmp.eq.s32.totalorder %s15, 1
      %p49 = scmp.ne.s32.totalorder %s44, %s46
      %p50 = scmp.eq.s32.totalorder %s15, 0
      %p51 = por %p49, %p50
      %p52 = scmp.ne.s32.totalorder %s44, %s46
      %p53 = scmp.eq.s32.totalorder %s20, 1
      %p54 = por %p52, %p53
      %p55 = scmp.ne.s32.totalorder %s46, %s47
      %p56 = scmp.eq.s32.totalorder %s20, 0
      %p57 = por %p55, %p56
      %p58 = scmp.ne.s32.totalorder %s46, %s47
      %p59 = scmp.eq.s32.totalorder %s21, 1
      %p60 = por %p58, %p59
      %p62 = scmp.ne.s32.totalorder %s47, %s61
      %p63 = scmp.eq.s32.totalorder %s21, 0
      %p64 = por %p62, %p63
      %s65 = ssub.s32 %s15, %s22
      %p66 = scmp.eq.s32.totalorder %s65, 0
      %s68 = sadd.s32 %s67, 1
      %s69 = scalar_select %p66, %s67, %s68
      %p72 = pneg %p66
      %p73 = scmp.eq.s32.totalorder %s15, 1
      %p74 = por %p72, %p73
      %p75 = scmp.ne.s32.totalorder %s67, %s70
      %p76 = scmp.eq.s32.totalorder %s15, 0
      %p77 = por %p75, %p76
      %p78 = scmp.ne.s32.totalorder %s67, %s70
      %p79 = scmp.eq.s32.totalorder %s20, 1
      %p80 = por %p78, %p79
      %p81 = scmp.ne.s32.totalorder %s70, %s71
      %p82 = scmp.eq.s32.totalorder %s20, 0
      %p83 = por %p81, %p82
      %p84 = scmp.ne.s32.totalorder %s70, %s71
      %p85 = scmp.eq.s32.totalorder %s21, 1
      %p86 = por %p84, %p85
      %p88 = scmp.ne.s32.totalorder %s71, %s87
      %p89 = scmp.eq.s32.totalorder %s21, 0
      %p90 = por %p88, %p89
      %s91 = ssub.s32 %s15, %s22
      %p92 = scmp.eq.s32.totalorder %s91, 0
      %s94 = sadd.s32 %s93, 1
      %s95 = scalar_select %p92, %s93, %s94
      %p98 = pneg %p92
      %p99 = scmp.eq.s32.totalorder %s15, 1
      %p100 = por %p98, %p99
      %p101 = scmp.ne.s32.totalorder %s93, %s96
      %p102 = scmp.eq.s32.totalorder %s15, 0
      %p103 = por %p101, %p102
      %p104 = scmp.ne.s32.totalorder %s93, %s96
      %p105 = scmp.eq.s32.totalorder %s20, 1
      %p106 = por %p104, %p105
      %p107 = scmp.ne.s32.totalorder %s96, %s97
      %p108 = scmp.eq.s32.totalorder %s20, 0
      %p109 = por %p107, %p108
      %p110 = scmp.ne.s32.totalorder %s96, %s97
      %p111 = scmp.eq.s32.totalorder %s21, 1
      %p112 = por %p110, %p111
      %p114 = scmp.ne.s32.totalorder %s97, %s113
      %p115 = scmp.eq.s32.totalorder %s21, 0
      %p116 = por %p114, %p115
      %p117 = scmp.le.s32.totalorder 1, %s15
      %p118 = scmp.lt.s32.totalorder %s15, 3
      %p119 = pnand %p117, %p118
      %p120 = pneg %p119
      // Predicated region
      $region9: #{tpu_custom_call.1} parent=5 // pred_check
        _
      $region10: #{tpu_custom_call.1} parent=5 // pred_check_branch
        %122 = sbr.rel (%p119) target = $region12
      $region11: #{tpu_custom_call.1} parent=5 // pred_region
        %s123 = ssub.s32 %s15, 1
        // Predicated region
        $region13: #{tpu_custom_call.1} parent=11 // pred_check
          %p124 = pneg %p36
        $region14: #{tpu_custom_call.1} parent=11 // pred_check_branch
          %126 = sbr.rel (%p124) target = $region16
        $region15: #{tpu_custom_call.1} parent=11 // pred_region
          _
        $region16: #{tpu_custom_call.1} parent=11 // pred_fallthru
          _
        // Predicated region
        $region17: #{tpu_custom_call.1} parent=11 // pred_check
          %p127 = pneg %p57
        $region18: #{tpu_custom_call.1} parent=11 // pred_check_branch
          %129 = sbr.rel (%p127) target = $region20
        $region19: #{tpu_custom_call.1} parent=11 // pred_region
          _
        $region20: #{tpu_custom_call.1} parent=11 // pred_fallthru
          _
      $region12: #{tpu_custom_call.1} parent=5 // pred_fallthru
        _
      %p130 = scmp.lt.s32.totalorder %s15, 2
      // Predicated region
      $region21: #{tpu_custom_call.1} parent=5 // pred_check
        %p131 = pneg %p130
      $region22: #{tpu_custom_call.1} parent=5 // pred_check_branch
        %133 = sbr.rel (%p131) target = $region24
      $region23: #{tpu_custom_call.1} parent=5 // pred_region
        // Predicated region
        $region25: #{tpu_custom_call.1} parent=23 // pred_check
          %p134 = pneg %p77
        $region26: #{tpu_custom_call.1} parent=23 // pred_check_branch
          %136 = sbr.rel (%p134) target = $region28
        $region27: #{tpu_custom_call.1} parent=23 // pred_region
          %s137 = sand.u32 %s67, 1
          %s138 = scalar_lea.sflag [#allocation5], %s137
          %s139 = sand.u32 %s67, 1
          %s140 = smul.addr %s139, 16
          %s141 = scalar_lea.vmem [#allocation4], %s140
          %s143 = ssub.s32 256, 256
          %144 = vsyncadd %s138, %s143
          %s145 = smul.addr %s15, 2
          %s146 = smul.addr %s145, 128
          %s147 = scalar_lea.hbm %s2, %s146
          %s149 = sshll.u32 %s141, 4
          %s150 = int_to_ptr.vmem [resolvable:$true] %s149
          %152 = dma.hbm_to_vmem [thread:$0]  %s147, 256, %s150, %s138
        $region28: #{tpu_custom_call.1} parent=23 // pred_fallthru
          _
      $region24: #{tpu_custom_call.1} parent=5 // pred_fallthru
        _
      %p153 = scmp.le.s32.totalorder 1, %s15
      %p154 = scmp.lt.s32.totalorder %s15, 3
      %p155 = pnand %p153, %p154
      %p156 = pneg %p155
      // Predicated region
      $region29: #{tpu_custom_call.1} parent=5 // pred_check
        _
      $region30: #{tpu_custom_call.1} parent=5 // pred_check_branch
        %158 = sbr.rel (%p155) target = $region32
      $region31: #{tpu_custom_call.1} parent=5 // pred_region
        %s159 = ssub.s32 %s15, 1
        %s160 = sand.u32 %s70, 1
        %s161 = scalar_lea.sflag [#allocation5], %s160
        %s162 = sand.u32 %s70, 1
        %s163 = smul.addr %s162, 16
        %s164 = scalar_lea.vmem [#allocation4], %s163
        // Predicated region
        $region33: #{tpu_custom_call.1} parent=31 // pred_check
          %p165 = pneg %p83
        $region34: #{tpu_custom_call.1} parent=31 // pred_check_branch
          %167 = sbr.rel (%p165) target = $region36
        $region35: #{tpu_custom_call.1} parent=31 // pred_region
          %168 = dma.done %s161, 256
        $region36: #{tpu_custom_call.1} parent=31 // pred_fallthru
          _
        %p169 = pneg %p36
        %p170 = pneg %p33
        %p171 = pneg %p57
        %p172 = pneg %p54
        %s173 = sand.u32 %s70, 1
        %s174 = scalar_lea.sflag [#allocation5], %s173
        %s175 = sand.u32 %s70, 1
        %s176 = smul.addr %s175, 16
        %s177 = scalar_lea.vmem [#allocation4], %s176
        %p178 = pneg %p83
        %p179 = pneg %p80
        %p180 = pneg %p109
        %p181 = pneg %p106
        %s182 = sand.u32 %s96, 1
        %s183 = scalar_lea.sflag [#allocation6], %s182
        %s184 = sand.u32 %s96, 1
        %s185 = smul.addr %s184, 16
        %s186 = scalar_lea.vmem [#allocation7], %s185
        %188 = vst [vmem:[#allocation2] sm:$0xf] 0
        %189 = vst [vmem:[#allocation2 + $0xc] sm:$0xf] 0
        %v190 = vld [vmem:[%s164] sm:$0xff]
        %v191 = vld [vmem:[%s164 + $0x8] sm:$0xff]
        %v192 = vpack.c.bf16 %v190, %v190
        %v193 = vpack.c.bf16 %v191, %v191
        %v196 = vunpack.c.l.b16 %v192
        %v197 = vunpack.c.l.b16 %v193
        %v198 = vpack.c.b16 %v197, %v196
        %200 = vst [vmem:[#allocation2 + $0x4] sm:$0xff] %v198
        %201 = vst [vmem:[#allocation3 + $0x20] sm:$0xcc] 0
        %202 = vst [vmem:[#allocation3 + $0x28] sm:$0xff] 0
        %v203 = vld [vmem:[%s1] sm:$0x5]
        %v204 = vld [vmem:[%s1] sm:$0xa]
        %v205 = vld [vmem:[#allocation2] sm:$0x33]
        %v206 = vld [vmem:[#allocation2 + $0x8] sm:$0x3]
        %v209 = vunpack.c.l.s4 1983009808
        %v210 = vunpack.c.0.s8 %v209
        %v211 = vlaneseq
        %v212 = vshrl.u32 %v211, 7
        %v213 = vsub.s32 %v210, %v212
        %v214 = vrot.slane %v203, %v213
        %v215 = vcombine.high %v214, %v214
        %v217 = vpack.i.b16 %v214, %v214
        %v219 = vlaneseq
        %v220 = vshrl.u32 %v219, 7
        %v221 = vsub.s32 0, %v220
        %v222 = vrot.slane %v217, %v221
        %v224 = vpack.i.b16 %v215, %v215
        %v226 = vlaneseq
        %v227 = vshrl.u32 %v226, 7
        %v228 = vsub.s32 0, %v227
        %v229 = vrot.slane %v224, %v228
        %v232 = vunpack.c.l.b16 %v222
        %v233 = vunpack.c.l.b16 %v229
        %v234 = vpack.c.b16 %v233, %v232
        %235 = vrot.lane.b32.xlu0 %v234, 111
        %v236 = vpop.permute.xlu0 %235
        %v237 = vrot.slane %v236, 4
        %vm238 = vcmask 908288
        %v239 = vsel %vm238, %v237, %v236
        %v242 = vmul.bf16 %v205, %v239
        %v243 = vmul.bf16 %v206, %v237
        %246 = vrot.lane.b32.xlu0 %v242, 17
        %v247 = vpop.permute.xlu0 %246
        %248 = vrot.lane.b32.xlu0 %v243, 17
        %v249 = vpop.permute.xlu0 %248
        %v250 = vrot.slane %v247, 4
        %v251 = vrot.slane %v249, 4
        %vm252 = vcmask 1043456
        %v253 = vsel %vm252, %v250, %v251
        %vm254 = vcmask 138240
        %v255 = vsel %vm254, %v247, %v253
        %257 = vst [vmem:[#allocation3] sm:$0x33] %v255
        %v258 = vld [vmem:[#allocation2] sm:$0x33]
        %v259 = vld [vmem:[#allocation2 + $0x8] sm:$0x3]
        %v262 = vrot.slane %v258, 6
        %v263 = vrot.slane %v259, 6
        %264 = vrot.lane.b32.xlu0 %v262, 16
        %v265 = vpop.permute.xlu0 %264
        %266 = vrot.lane.b32.xlu0 %v263, 16
        %v267 = vpop.permute.xlu0 %266
        %v268 = vrot.slane %v265, 4
        %v269 = vrot.slane %v267, 4
        %v270 = vsel %vm252, %v268, %v269
        %vm271 = vcmask 130048
        %v272 = vsel %vm271, %v265, %v270
        %274 = vst [vmem:[#allocation3] sm:$0xcc] %v272
        %v275 = vld [vmem:[#allocation2] sm:$0x33]
        %v276 = vld [vmem:[#allocation2 + $0x8] sm:$0x3]
        %v279 = vunpack.c.l.s4 1983009808
        %v280 = vunpack.c.0.s8 %v279
        %v281 = vlaneseq
        %v282 = vshrl.u32 %v281, 7
        %v283 = vsub.s32 %v280, %v282
        %v284 = vrot.slane %v204, %v283
        %v285 = vcombine.high %v284, %v284
        %v287 = vpack.i.b16 %v284, %v284
        %v289 = vlaneseq
        %v290 = vshrl.u32 %v289, 7
        %v291 = vsub.s32 1, %v290
        %v292 = vrot.slane %v287, %v291
        %v294 = vpack.i.b16 %v285, %v285
        %v296 = vlaneseq
        %v297 = vshrl.u32 %v296, 7
        %v298 = vsub.s32 1, %v297
        %v299 = vrot.slane %v294, %v298
        %v302 = vunpack.c.l.b16 %v292
        %v303 = vunpack.c.l.b16 %v299
        %v304 = vpack.c.b16 %v303, %v302
        %305 = vrot.lane.b32.xlu0 %v304, 113
        %v306 = vpop.permute.xlu0 %305
        %v307 = vrot.slane %v306, 4
        %vm308 = vcmask 924672
        %v309 = vsel %vm308, %v307, %v306
        %v312 = vmul.bf16 %v275, %v309
        %v313 = vmul.bf16 %v276, %v307
        %316 = vrot.lane.b32.xlu0 %v312, 15
        %v317 = vpop.permute.xlu0 %316
        %318 = vrot.lane.b32.xlu0 %v313, 15
        %v319 = vpop.permute.xlu0 %318
        %v320 = vrot.slane %v317, 4
        %v321 = vrot.slane %v319, 4
        %v322 = vsel %vm252, %v320, %v321
        %vm323 = vcmask 121856
        %v324 = vsel %vm323, %v317, %v322
        %326 = vst [vmem:[#allocation3 + $0x8] sm:$0x33] %v324
        %v327 = vld [vmem:[#allocation2] sm:$0x33]
        %v328 = vld [vmem:[#allocation2 + $0x8] sm:$0x3]
        %329 = vrot.lane.b32.xlu0 %v234, 127
        %v330 = vpop.permute.xlu0 %329
        %v331 = vrot.slane %v330, 4
        %vm332 = vcmask 1039360
        %v333 = vsel %vm332, %v331, %v330
        %v336 = vmul.bf16 %v327, %v333
        %v337 = vmul.bf16 %v328, %v331
        %v340 = vrot.slane %v336, 6
        %v341 = vrot.slane %v337, 6
        %342 = vrot.lane.b32.xlu0 %v340, 1
        %v343 = vpop.permute.xlu0 %342
        %344 = vrot.lane.b32.xlu0 %v341, 1
        %v345 = vpop.permute.xlu0 %344
        %v346 = vrot.slane %v343, 4
        %v347 = vrot.slane %v345, 4
        %v348 = vsel %vm252, %v346, %v347
        %vm349 = vcmask 7168
        %v350 = vsel %vm349, %v343, %v348
        %352 = vst [vmem:[#allocation3 + $0x8] sm:$0xcc] %v350
        %v353 = vld [vmem:[#allocation2 + $0x4] sm:$0x33]
        %354 = vst [vmem:[#allocation3 + $0x10] sm:$0x33] %v353
        %v355 = vld [vmem:[#allocation2 + $0x4] sm:$0x33]
        %v356 = vld [vmem:[#allocation2 + $0xc] sm:$0x3]
        %357 = vrot.lane.b32.xlu0 %v304, 1
        %v358 = vpop.permute.xlu0 %357
        %v359 = vrot.slane %v358, 4
        %v360 = vsel %vm349, %v359, %v358
        %v363 = vmul.bf16 %v355, %v360
        %v364 = vmul.bf16 %v356, %v359
        %v367 = vrot.slane %v363, 6
        %v368 = vrot.slane %v364, 6
        %369 = vrot.lane.b32.xlu0 %v367, 127
        %v370 = vpop.permute.xlu0 %369
        %371 = vrot.lane.b32.xlu0 %v368, 127
        %v372 = vpop.permute.xlu0 %371
        %v373 = vrot.slane %v370, 4
        %v374 = vrot.slane %v372, 4
        %v375 = vsel %vm252, %v373, %v374
        %v376 = vsel %vm332, %v370, %v375
        %378 = vst [vmem:[#allocation3 + $0x10] sm:$0xcc] %v376
        %v379 = vld [vmem:[#allocation2 + $0x4] sm:$0x33]
        %v380 = vld [vmem:[#allocation2 + $0xc] sm:$0x3]
        %381 = vrot.lane.b32.xlu0 %v234, 15
        %v382 = vpop.permute.xlu0 %381
        %v383 = vrot.slane %v382, 4
        %v384 = vsel %vm323, %v383, %v382
        %v387 = vmul.bf16 %v379, %v384
        %v388 = vmul.bf16 %v380, %v383
        %391 = vrot.lane.b32.xlu0 %v387, 113
        %v392 = vpop.permute.xlu0 %391
        %393 = vrot.lane.b32.xlu0 %v388, 113
        %v394 = vpop.permute.xlu0 %393
        %v395 = vrot.slane %v392, 4
        %v396 = vrot.slane %v394, 4
        %v397 = vsel %vm252, %v395, %v396
        %v398 = vsel %vm308, %v392, %v397
        %400 = vst [vmem:[#allocation3 + $0x18] sm:$0x33] %v398
        %v401 = vld [vmem:[#allocation2 + $0x4] sm:$0x33]
        %v402 = vld [vmem:[#allocation2 + $0xc] sm:$0x3]
        %v405 = vrot.slane %v401, 6
        %v406 = vrot.slane %v402, 6
        %407 = vrot.lane.b32.xlu0 %v405, 112
        %v408 = vpop.permute.xlu0 %407
        %409 = vrot.lane.b32.xlu0 %v406, 112
        %v410 = vpop.permute.xlu0 %409
        %v411 = vrot.slane %v408, 4
        %v412 = vrot.slane %v410, 4
        %v413 = vsel %vm252, %v411, %v412
        %vm414 = vcmask 916480
        %v415 = vsel %vm414, %v408, %v413
        %417 = vst [vmem:[#allocation3 + $0x18] sm:$0xcc] %v415
        %v418 = vld [vmem:[#allocation2 + $0x4] sm:$0x33]
        %v419 = vld [vmem:[#allocation2 + $0xc] sm:$0x3]
        %420 = vrot.lane.b32.xlu0 %v304, 17
        %v421 = vpop.permute.xlu0 %420
        %v422 = vrot.slane %v421, 4
        %v423 = vsel %vm254, %v422, %v421
        %v426 = vmul.bf16 %v418, %v423
        %v427 = vmul.bf16 %v419, %v422
        %430 = vrot.lane.b32.xlu0 %v426, 111
        %v431 = vpop.permute.xlu0 %430
        %432 = vrot.lane.b32.xlu0 %v427, 111
        %v433 = vpop.permute.xlu0 %432
        %v434 = vrot.slane %v431, 4
        %v435 = vrot.slane %v433, 4
        %v436 = vsel %vm252, %v434, %v435
        %v437 = vsel %vm238, %v431, %v436
        %439 = vst [vmem:[#allocation3 + $0x20] sm:$0x33] %v437
        %v440 = vld [vmem:[%s0] sm:$0x3]
        %v441 = vld [vmem:[#allocation3] sm:$0xff]
        %v442 = vld [vmem:[#allocation3 + $0x8] sm:$0xff]
        %v443 = vld [vmem:[#allocation3 + $0x10] sm:$0xff]
        %v444 = vld [vmem:[#allocation3 + $0x18] sm:$0xff]
        %v445 = vld [vmem:[#allocation3 + $0x20] sm:$0xff]
        %v446 = vld [vmem:[#allocation3 + $0x28] sm:$0xff]
        %v453 = vunpack.c.l.b16 %v441
        %v454 = vunpack.c.h.b16 %v441
        %v455 = vunpack.c.l.b16 %v442
        %v456 = vunpack.c.h.b16 %v442
        %v457 = vunpack.c.l.b16 %v443
        %v458 = vunpack.c.h.b16 %v443
        %v459 = vunpack.c.l.b16 %v444
        %v460 = vunpack.c.h.b16 %v444
        %v461 = vunpack.c.l.b16 %v445
        %v462 = vunpack.c.h.b16 %v445
        %v463 = vunpack.c.l.b16 %v446
        %v464 = vunpack.c.h.b16 %v446
        %v465 = vpack.c.b16 %v455, %v453
        %v466 = vpack.c.b16 %v456, %v454
        %v467 = vpack.c.b16 %v459, %v457
        %v468 = vpack.c.b16 %v460, %v458
        %v469 = vpack.c.b16 %v463, %v461
        %v470 = vpack.c.b16 %v464, %v462
        %vm477 = vcmask 392192
        %v479 = vsel %vm477, %v440, 0
        %481 = vmatprep.subr.bf16.mxu0 0
        %482 = vmatpush1.bf16.msra.mxu0 0
        %483 = vmatprep.subr.bf16.mxu0 0
        %484 = vmatpush1.bf16.msra.mxu0 0
        %485 = vmatprep.subr.bf16.mxu0 0
        %486 = vmatpush1.bf16.msra.mxu0 0
        %487 = vmatprep.subr.bf16.mxu0 0
        %488 = vmatpush1.bf16.msra.mxu0 0
        %489 = vmatprep.subr.bf16.mxu0 0
        %490 = vmatpush1.bf16.msra.mxu0 0
        %491 = vmatprep.subr.bf16.mxu0 %v470
        %492 = vmatpush1.bf16.msra.mxu0 %v469
        %493 = vmatprep.subr.bf16.mxu0 %v468
        %494 = vmatpush1.bf16.msra.mxu0 %v467
        %495 = vmatprep.subr.bf16.mxu0 %v466
        %496 = vmatpush1.bf16.msra.mxu0 %v465
        %497 = vmatprep.subr.bf16.mxu0 0
        %498 = vmatpush2.bf16.msra.mxu0 0
        %499 = vmatprep.subr.bf16.mxu0 0
        %500 = vmatpush2.bf16.msra.mxu0 0
        %501 = vmatprep.subr.bf16.mxu0 0
        %502 = vmatpush2.bf16.msra.mxu0 0
        %503 = vmatprep.subr.bf16.mxu0 0
        %504 = vmatpush2.bf16.msra.mxu0 0
        %505 = vmatprep.subr.bf16.mxu0 0
        %506 = vmatpush2.bf16.msra.mxu0 0
        %507 = vmatprep.subr.bf16.mxu0 0
        %508 = vmatpush2.bf16.msra.mxu0 0
        %509 = vmatprep.subr.bf16.mxu0 0
        %510 = vmatpush2.bf16.msra.mxu0 0
        %511 = vmatprep.subr.bf16.mxu0 0
        %512 = vmatpush2.bf16.msra.mxu0 0
        %513 = vmatprep.mubr.bf16.mxu0 0
        %514 = vmatmul.mubr.bf16.gmra.mxu0 %v479
        %v515 = vpop.f32.mrf.mxu0
        %v516 = vadd.f32 0.0, %v515
        %v517 = vpop.f32.mrf.mxu0
        %v518 = vadd.f32 0.0, %v517
        %v519 = vpop.f32.mrf.mxu0
        %v520 = vpop.f32.mrf.mxu0
        %521 = vdwg.mxu0
        %522 = vst [vmem:[%s186] sm:$0xf] %v516
        %523 = vst [vmem:[%s186 + $0x8] sm:$0xf] %v518
        %s524 = scalar_lea.vmem %s1, 4
        %v525 = vld [vmem:[%s524] sm:$0x5]
        %v526 = vld [vmem:[%s524] sm:$0xa]
        %v527 = vld [vmem:[#allocation2] sm:$0xcc]
        %v528 = vld [vmem:[#allocation2 + $0x8] sm:$0xc]
        %v531 = vunpack.c.l.s4 1983009808
        %v532 = vunpack.c.0.s8 %v531
        %v533 = vlaneseq
        %v534 = vshrl.u32 %v533, 7
        %v535 = vsub.s32 %v532, %v534
        %v536 = vrot.slane %v525, %v535
        %v537 = vcombine.high %v536, %v536
        %v539 = vpack.i.b16 %v536, %v536
        %v541 = vlaneseq
        %v542 = vshrl.u32 %v541, 7
        %v543 = vsub.s32 0, %v542
        %v544 = vrot.slane %v539, %v543
        %v546 = vpack.i.b16 %v537, %v537
        %v548 = vlaneseq
        %v549 = vshrl.u32 %v548, 7
        %v550 = vsub.s32 0, %v549
        %v551 = vrot.slane %v546, %v550
        %v554 = vunpack.c.l.b16 %v544
        %v555 = vunpack.c.l.b16 %v551
        %v556 = vpack.c.b16 %v555, %v554
        %557 = vrot.lane.b32.xlu0 %v556, 94
        %v558 = vpop.permute.xlu0 %557
        %v559 = vrot.slane %v558, 4
        %vm560 = vcmask 769024
        %v561 = vsel %vm560, %v559, %v558
        %v564 = vmul.bf16 %v527, %v561
        %v565 = vmul.bf16 %v528, %v559
        %v568 = vrot.slane %v564, 6
        %v569 = vrot.slane %v568, 4
        %v570 = vrot.slane %v565, 6
        %v571 = vrot.slane %v570, 4
        %572 = vrot.lane.b32.xlu0 %v569, 34
        %v573 = vpop.permute.xlu0 %572
        %574 = vrot.lane.b32.xlu0 %v571, 34
        %v575 = vpop.permute.xlu0 %574
        %v576 = vrot.slane %v573, 4
        %v577 = vrot.slane %v575, 4
        %v578 = vsel %vm252, %v576, %v577
        %vm579 = vcmask 277504
        %v580 = vsel %vm579, %v573, %v578
        %582 = vst [vmem:[#allocation3] sm:$0x33] %v580
        %v583 = vld [vmem:[#allocation2] sm:$0xcc]
        %v584 = vld [vmem:[#allocation2 + $0x8] sm:$0xc]
        %587 = vrot.lane.b32.xlu0 %v583, 32
        %v588 = vpop.permute.xlu0 %587
        %589 = vrot.lane.b32.xlu0 %v584, 32
        %v590 = vpop.permute.xlu0 %589
        %v591 = vrot.slane %v588, 4
        %v592 = vrot.slane %v590, 4
        %v593 = vsel %vm252, %v591, %v592
        %vm594 = vcmask 261120
        %v595 = vsel %vm594, %v588, %v593
        %597 = vst [vmem:[#allocation3] sm:$0xcc] %v595
        %v598 = vld [vmem:[#allocation2] sm:$0xcc]
        %v599 = vld [vmem:[#allocation2 + $0x8] sm:$0xc]
        %v602 = vunpack.c.l.s4 1983009808
        %v603 = vunpack.c.0.s8 %v602
        %v604 = vlaneseq
        %v605 = vshrl.u32 %v604, 7
        %v606 = vsub.s32 %v603, %v605
        %v607 = vrot.slane %v526, %v606
        %v608 = vcombine.high %v607, %v607
        %v610 = vpack.i.b16 %v607, %v607
        %v612 = vlaneseq
        %v613 = vshrl.u32 %v612, 7
        %v614 = vsub.s32 1, %v613
        %v615 = vrot.slane %v610, %v614
        %v617 = vpack.i.b16 %v608, %v608
        %v619 = vlaneseq
        %v620 = vshrl.u32 %v619, 7
        %v621 = vsub.s32 1, %v620
        %v622 = vrot.slane %v617, %v621
        %v625 = vunpack.c.l.b16 %v615
        %v626 = vunpack.c.l.b16 %v622
        %v627 = vpack.c.b16 %v626, %v625
        %628 = vrot.lane.b32.xlu0 %v627, 98
        %v629 = vpop.permute.xlu0 %628
        %v630 = vrot.slane %v629, 4
        %vm631 = vcmask 801792
        %v632 = vsel %vm631, %v630, %v629
        %v635 = vmul.bf16 %v598, %v632
        %v636 = vmul.bf16 %v599, %v630
        %v639 = vrot.slane %v635, 6
        %v640 = vrot.slane %v639, 4
        %v641 = vrot.slane %v636, 6
        %v642 = vrot.slane %v641, 4
        %643 = vrot.lane.b32.xlu0 %v640, 30
        %v644 = vpop.permute.xlu0 %643
        %645 = vrot.lane.b32.xlu0 %v642, 30
        %v646 = vpop.permute.xlu0 %645
        %v647 = vrot.slane %v644, 4
        %v648 = vrot.slane %v646, 4
        %v649 = vsel %vm252, %v647, %v648
        %vm650 = vcmask 244736
        %v651 = vsel %vm650, %v644, %v649
        %653 = vst [vmem:[#allocation3 + $0x8] sm:$0x33] %v651
        %v654 = vld [vmem:[#allocation2] sm:$0xcc]
        %v655 = vld [vmem:[#allocation2 + $0x8] sm:$0xc]
        %656 = vrot.lane.b32.xlu0 %v556, 126
        %v657 = vpop.permute.xlu0 %656
        %v658 = vrot.slane %v657, 4
        %vm659 = vcmask 1031168
        %v660 = vsel %vm659, %v658, %v657
        %v663 = vmul.bf16 %v654, %v660
        %v664 = vmul.bf16 %v655, %v658
        %667 = vrot.lane.b32.xlu0 %v663, 2
        %v668 = vpop.permute.xlu0 %667
        %669 = vrot.lane.b32.xlu0 %v664, 2
        %v670 = vpop.permute.xlu0 %669
        %v671 = vrot.slane %v668, 4
        %v672 = vrot.slane %v670, 4
        %v673 = vsel %vm252, %v671, %v672
        %vm674 = vcmask 15360
        %v675 = vsel %vm674, %v668, %v673
        %677 = vst [vmem:[#allocation3 + $0x8] sm:$0xcc] %v675
        %v678 = vld [vmem:[#allocation2 + $0x4] sm:$0xcc]
        %v680 = vrot.slane %v678, 6
        %v681 = vrot.slane %v680, 4
        %683 = vst [vmem:[#allocation3 + $0x10] sm:$0x33] %v681
        %v684 = vld [vmem:[#allocation2 + $0x4] sm:$0xcc]
        %v685 = vld [vmem:[#allocation2 + $0xc] sm:$0xc]
        %686 = vrot.lane.b32.xlu0 %v627, 2
        %v687 = vpop.permute.xlu0 %686
        %v688 = vrot.slane %v687, 4
        %v689 = vsel %vm674, %v688, %v687
        %v692 = vmul.bf16 %v684, %v689
        %v693 = vmul.bf16 %v685, %v688
        %696 = vrot.lane.b32.xlu0 %v692, 126
        %v697 = vpop.permute.xlu0 %696
        %698 = vrot.lane.b32.xlu0 %v693, 126
        %v699 = vpop.permute.xlu0 %698
        %v700 = vrot.slane %v697, 4
        %v701 = vrot.slane %v699, 4
        %v702 = vsel %vm252, %v700, %v701
        %v703 = vsel %vm659, %v697, %v702
        %705 = vst [vmem:[#allocation3 + $0x10] sm:$0xcc] %v703
        %v706 = vld [vmem:[#allocation2 + $0x4] sm:$0xcc]
        %v707 = vld [vmem:[#allocation2 + $0xc] sm:$0xc]
        %708 = vrot.lane.b32.xlu0 %v556, 30
        %v709 = vpop.permute.xlu0 %708
        %v710 = vrot.slane %v709, 4
        %v711 = vsel %vm650, %v710, %v709
        %v714 = vmul.bf16 %v706, %v711
        %v715 = vmul.bf16 %v707, %v710
        %v718 = vrot.slane %v714, 6
        %v719 = vrot.slane %v718, 4
        %v720 = vrot.slane %v715, 6
        %v721 = vrot.slane %v720, 4
        %722 = vrot.lane.b32.xlu0 %v719, 98
        %v723 = vpop.permute.xlu0 %722
        %724 = vrot.lane.b32.xlu0 %v721, 98
        %v725 = vpop.permute.xlu0 %724
        %v726 = vrot.slane %v723, 4
        %v727 = vrot.slane %v725, 4
        %v728 = vsel %vm252, %v726, %v727
        %v729 = vsel %vm631, %v723, %v728
        %731 = vst [vmem:[#allocation3 + $0x18] sm:$0x33] %v729
        %v732 = vld [vmem:[#allocation2 + $0x4] sm:$0xcc]
        %v733 = vld [vmem:[#allocation2 + $0xc] sm:$0xc]
        %736 = vrot.lane.b32.xlu0 %v732, 96
        %v737 = vpop.permute.xlu0 %736
        %738 = vrot.lane.b32.xlu0 %v733, 96
        %v739 = vpop.permute.xlu0 %738
        %v740 = vrot.slane %v737, 4
        %v741 = vrot.slane %v739, 4
        %v742 = vsel %vm252, %v740, %v741
        %vm743 = vcmask 785408
        %v744 = vsel %vm743, %v737, %v742
        %746 = vst [vmem:[#allocation3 + $0x18] sm:$0xcc] %v744
        %v747 = vld [vmem:[#allocation2 + $0x4] sm:$0xcc]
        %v748 = vld [vmem:[#allocation2 + $0xc] sm:$0xc]
        %749 = vrot.lane.b32.xlu0 %v627, 34
        %v750 = vpop.permute.xlu0 %749
        %v751 = vrot.slane %v750, 4
        %v752 = vsel %vm579, %v751, %v750
        %v755 = vmul.bf16 %v747, %v752
        %v756 = vmul.bf16 %v748, %v751
        %v759 = vrot.slane %v755, 6
        %v760 = vrot.slane %v759, 4
        %v761 = vrot.slane %v756, 6
        %v762 = vrot.slane %v761, 4
        %763 = vrot.lane.b32.xlu0 %v760, 94
        %v764 = vpop.permute.xlu0 %763
        %765 = vrot.lane.b32.xlu0 %v762, 94
        %v766 = vpop.permute.xlu0 %765
        %v767 = vrot.slane %v764, 4
        %v768 = vrot.slane %v766, 4
        %v769 = vsel %vm252, %v767, %v768
        %v770 = vsel %vm560, %v764, %v769
        %772 = vst [vmem:[#allocation3 + $0x20] sm:$0x33] %v770
        %s773 = scalar_lea.vmem %s0, 2
        %v774 = vld [vmem:[%s773] sm:$0x3]
        %v775 = vld [vmem:[#allocation3] sm:$0xff]
        %v776 = vld [vmem:[#allocation3 + $0x8] sm:$0xff]
        %v777 = vld [vmem:[#allocation3 + $0x10] sm:$0xff]
        %v778 = vld [vmem:[#allocation3 + $0x18] sm:$0xff]
        %v779 = vld [vmem:[#allocation3 + $0x20] sm:$0xff]
        %v780 = vld [vmem:[#allocation3 + $0x28] sm:$0xff]
        %v787 = vunpack.c.l.b16 %v775
        %v788 = vunpack.c.h.b16 %v775
        %v789 = vunpack.c.l.b16 %v776
        %v790 = vunpack.c.h.b16 %v776
        %v791 = vunpack.c.l.b16 %v777
        %v792 = vunpack.c.h.b16 %v777
        %v793 = vunpack.c.l.b16 %v778
        %v794 = vunpack.c.h.b16 %v778
        %v795 = vunpack.c.l.b16 %v779
        %v796 = vunpack.c.h.b16 %v779
        %v797 = vunpack.c.l.b16 %v780
        %v798 = vunpack.c.h.b16 %v780
        %v799 = vpack.c.b16 %v789, %v787
        %v800 = vpack.c.b16 %v790, %v788
        %v801 = vpack.c.b16 %v793, %v791
        %v802 = vpack.c.b16 %v794, %v792
        %v803 = vpack.c.b16 %v797, %v795
        %v804 = vpack.c.b16 %v798, %v796
        %v812 = vsel %vm477, %v774, 0
        %814 = vmatprep.subr.bf16.mxu0 0
        %815 = vmatpush1.bf16.msra.mxu0 0
        %816 = vmatprep.subr.bf16.mxu0 0
        %817 = vmatpush1.bf16.msra.mxu0 0
        %818 = vmatprep.subr.bf16.mxu0 0
        %819 = vmatpush1.bf16.msra.mxu0 0
        %820 = vmatprep.subr.bf16.mxu0 0
        %821 = vmatpush1.bf16.msra.mxu0 0
        %822 = vmatprep.subr.bf16.mxu0 0
        %823 = vmatpush1.bf16.msra.mxu0 0
        %824 = vmatprep.subr.bf16.mxu0 %v804
        %825 = vmatpush1.bf16.msra.mxu0 %v803
        %826 = vmatprep.subr.bf16.mxu0 %v802
        %827 = vmatpush1.bf16.msra.mxu0 %v801
        %828 = vmatprep.subr.bf16.mxu0 %v800
        %829 = vmatpush1.bf16.msra.mxu0 %v799
        %830 = vmatprep.subr.bf16.mxu0 0
        %831 = vmatpush2.bf16.msra.mxu0 0
        %832 = vmatprep.subr.bf16.mxu0 0
        %833 = vmatpush2.bf16.msra.mxu0 0
        %834 = vmatprep.subr.bf16.mxu0 0
        %835 = vmatpush2.bf16.msra.mxu0 0
        %836 = vmatprep.subr.bf16.mxu0 0
        %837 = vmatpush2.bf16.msra.mxu0 0
        %838 = vmatprep.subr.bf16.mxu0 0
        %839 = vmatpush2.bf16.msra.mxu0 0
        %840 = vmatprep.subr.bf16.mxu0 0
        %841 = vmatpush2.bf16.msra.mxu0 0
        %842 = vmatprep.subr.bf16.mxu0 0
        %843 = vmatpush2.bf16.msra.mxu0 0
        %844 = vmatprep.subr.bf16.mxu0 0
        %845 = vmatpush2.bf16.msra.mxu0 0
        %846 = vmatprep.mubr.bf16.mxu0 0
        %847 = vmatmul.mubr.bf16.gmra.mxu0 %v812
        %v848 = vpop.f32.mrf.mxu0
        %v849 = vadd.f32 0.0, %v848
        %v850 = vpop.f32.mrf.mxu0
        %v851 = vadd.f32 0.0, %v850
        %v852 = vpop.f32.mrf.mxu0
        %v853 = vpop.f32.mrf.mxu0
        %854 = vdwg.mxu0
        %v857 = vrot.slane %v849, 4
        %v858 = vrot.slane %v851, 4
        %861 = vst [vmem:[%s186] sm:$0xf0] %v857
        %862 = vst [vmem:[%s186 + $0x8] sm:$0xf0] %v858
        %s863 = sand.u32 %s96, 1
        %s864 = scalar_lea.sflag [#allocation6], %s863
        %s865 = sand.u32 %s96, 1
        %s866 = smul.addr %s865, 16
        %s867 = scalar_lea.vmem [#allocation7], %s866
        // Predicated region
        $region37: #{tpu_custom_call.1} parent=31 // pred_check
          %p868 = pneg %p106
        $region38: #{tpu_custom_call.1} parent=31 // pred_check_branch
          %870 = sbr.rel (%p868) target = $region40
        $region39: #{tpu_custom_call.1} parent=31 // pred_region
          %s872 = ssub.s32 256, 256
          %873 = vsyncadd %s864, %s872
          %s874 = smul.addr %s20, 2
          %s875 = smul.addr %s874, 128
          %s876 = scalar_lea.hbm %s3, %s875
          %s878 = sshll.u32 %s867, 4
          %s879 = int_to_ptr.vmem [resolvable:$true] %s878
          %881 = dma.vmem_to_hbm [thread:$0]  %s879, 256, %s876, %s864
        $region40: #{tpu_custom_call.1} parent=31 // pred_fallthru
          _
      $region32: #{tpu_custom_call.1} parent=5 // pred_fallthru
        _
      %p882 = scmp.le.s32.totalorder 2, %s15
      // Predicated region
      $region41: #{tpu_custom_call.1} parent=5 // pred_check
        %p883 = pneg %p882
      $region42: #{tpu_custom_call.1} parent=5 // pred_check_branch
        %885 = sbr.rel (%p883) target = $region44
      $region43: #{tpu_custom_call.1} parent=5 // pred_region
        %s886 = ssub.s32 %s15, 2
        // Predicated region
        $region45: #{tpu_custom_call.1} parent=43 // pred_check
          %p887 = pneg %p112
        $region46: #{tpu_custom_call.1} parent=43 // pred_check_branch
          %889 = sbr.rel (%p887) target = $region48
        $region47: #{tpu_custom_call.1} parent=43 // pred_region
          %s890 = sand.u32 %s97, 1
          %s891 = scalar_lea.sflag [#allocation6], %s890
          %s892 = sand.u32 %s97, 1
          %s893 = smul.addr %s892, 16
          %s894 = scalar_lea.vmem [#allocation7], %s893
          %895 = dma.done %s891, 256
        $region48: #{tpu_custom_call.1} parent=43 // pred_fallthru
          _
      $region44: #{tpu_custom_call.1} parent=5 // pred_fallthru
        _
    $region6: #{tpu_custom_call.1} parent=1 // loop_footer
      %s19 = sadd.s32 1, %s15
    $region7: #{tpu_custom_call.1} parent=1 // loop_footer_branch
      %14 = sbr.rel target = $region3
    $region8: #{tpu_custom_call.1} parent=1 // loop_exit
      _
    %896 = vsyncpa [#allocation5], 1
    %s897 = scalar_lea.sflag [#allocation5], 1
    %898 = vsyncpa %s897, 1
    %899 = vsyncpa [#allocation6], 1
    %s900 = scalar_lea.sflag [#allocation6], 1
    %901 = vsyncpa %s900, 1

</llo_original>
